<compile_context>
chip_gen: v5e
topology: v5e:2x2
jax: 0.10.0
libtpu: 0.0.40
codegen_flags: <defaults>
</compile_context>

<pallas_src>
import functools

import jax
import jax.numpy as jnp
from jax.experimental import pallas as pl
from jax.experimental.pallas import tpu as pltpu


def _round_up(x, m):
    return ((x + m - 1) // m) * m


# -----------------------------------------------------------------------------
# Kernel 1: tiled ContrastiveLoss over a precomputed [B, C] similarity matrix.
# -----------------------------------------------------------------------------
def _contrastive_loss_kernel(sim_ref, cat_ref, hinge_ref, pos_acc, neg_acc, *,
                             margin, hard_negative, tile_c, inv_cm1):
    kc = pl.program_id(1)

    @pl.when(kc == 0)
    def _init():
        pos_acc[...] = jnp.zeros_like(pos_acc)
        if hard_negative:
            neg_acc[...] = jnp.full_like(neg_acc, -jnp.inf)
        else:
            neg_acc[...] = jnp.zeros_like(neg_acc)

    # DMA'd in native dtype (e.g. bf16); one explicit in-register upcast to f32.
    sim = sim_ref[...].astype(jnp.float32)            # (tile_b, tile_c)
    cat = cat_ref[...]                                # (tile_b, 1) int32

    col = jax.lax.broadcasted_iota(jnp.int32, sim.shape, 1) + kc * tile_c
    mask = col == cat                                 # (tile_b, tile_c) bool
    maskf = mask.astype(jnp.float32)

    pos_tile = jnp.sum(sim * maskf, axis=-1, keepdims=True)
    pos_acc[...] += pos_tile

    if hard_negative:
        # single select; finite sim + (-inf) == -inf (no NaN)
        neg_bias = jnp.where(mask, jnp.float32(-jnp.inf), jnp.float32(0.0))
        neg_tile = jnp.max(sim + neg_bias, axis=-1, keepdims=True)
        neg_acc[...] = jnp.maximum(neg_acc[...], neg_tile)
    else:
        # sum of negatives = sum(all) - positive (reuses pos_tile, no 2nd select)
        neg_acc[...] += jnp.sum(sim, axis=-1, keepdims=True) - pos_tile

    @pl.when(kc == pl.num_programs(1) - 1)
    def _fini():
        neg = neg_acc[...]
        if not hard_negative:
            neg = neg * inv_cm1                       # multiply by precomputed 1/(C-1)
        hinge_ref[...] = jnp.maximum(neg - pos_acc[...] + margin, 0.0)


def contrastive_loss(similarities, categories, *, margin=0.2, hard_negative=True,
                     tile_b=256, tile_c=2048):
    """similarities: [B, C] (f32/bf16), categories: [B] int -> scalar f32 loss."""
    B, C = similarities.shape
    # Tiles: sublane multiple of 16 (bf16-friendly), lane multiple of 128. Defaults keep
    # the double-buffered input blocks well under the scoped-VMEM default.
    tile_b = _round_up(min(tile_b, _round_up(B, 16)), 16)
    tile_c = _round_up(min(tile_c, _round_up(C, 128)), 128)
    b_pad = _round_up(B, tile_b)
    c_pad = _round_up(C, tile_c)

    # Pad C with a value that never wins the hard-negative max yet stays finite (so
    # mask * pad == 0 in the positive gather); pad with 0 for the mean-negative path.
    c_fill = float(jnp.finfo(similarities.dtype).min) if hard_negative else 0.0
    sim_p = jnp.pad(similarities, ((0, b_pad - B), (0, c_pad - C)),
                    constant_values=c_fill)
    cat_p = jnp.pad(categories.astype(jnp.int32).reshape(B, 1),
                    ((0, b_pad - B), (0, 0)), constant_values=-1)

    kernel = functools.partial(
        _contrastive_loss_kernel,
        margin=float(margin), hard_negative=bool(hard_negative),
        tile_c=tile_c, inv_cm1=1.0 / max(C - 1, 1))

    hinge = pl.pallas_call(
        kernel,
        out_shape=jax.ShapeDtypeStruct((b_pad, 1), jnp.float32),
        grid_spec=pltpu.PrefetchScalarGridSpec(
            num_scalar_prefetch=0,
            grid=(b_pad // tile_b, c_pad // tile_c),       # C (reduction) axis last
            in_specs=[
                pl.BlockSpec((tile_b, tile_c), lambda i, k: (i, k)),
                pl.BlockSpec((tile_b, 1), lambda i, k: (i, 0)),
            ],
            out_specs=pl.BlockSpec((tile_b, 1), lambda i, k: (i, 0)),
            scratch_shapes=[pltpu.VMEM((tile_b, 1), jnp.float32),
                            pltpu.VMEM((tile_b, 1), jnp.float32)],
        ),
        compiler_params=pltpu.CompilerParams(
            dimension_semantics=("parallel", "arbitrary")),
    )(sim_p, cat_p)

    # Finish the tiny reduction in the wrapper; multiply by 1/B instead of dividing.
    return jnp.sum(hinge[:B, 0]) * (1.0 / B)


# -----------------------------------------------------------------------------
# Kernel 2: fused CategoryEmbeddingModel forward (from embeddings onward):
#   cosine-sim(text_emb, category_emb) -> argmax prediction + ContrastiveLoss.
# -----------------------------------------------------------------------------
def _fused_forward_kernel(x_ref, w_ref, cat_ref, pred_ref, hinge_ref,
                          xn_sc, pos_acc, neg_acc, max_acc, idx_acc, *,
                          margin, hard_negative, tile_c, num_cat, has_c_pad,
                          inv_cm1, eps):
    kc = pl.program_id(1)

    @pl.when(kc == 0)
    def _init():
        x = x_ref[...].astype(jnp.float32)            # (tile_b, D)
        inv_n = jax.lax.rsqrt(
            jnp.maximum(jnp.sum(x * x, axis=-1, keepdims=True), eps * eps))
        xn_sc[...] = x * inv_n                        # cached across all C tiles
        pos_acc[...] = jnp.zeros_like(pos_acc)
        if hard_negative:
            neg_acc[...] = jnp.full_like(neg_acc, -jnp.inf)
        else:
            neg_acc[...] = jnp.zeros_like(neg_acc)
        max_acc[...] = jnp.full_like(max_acc, -jnp.inf)
        idx_acc[...] = jnp.zeros_like(idx_acc)

    w = w_ref[...].astype(jnp.float32)                # (tile_c, D)
    inv_wn = jax.lax.rsqrt(
        jnp.maximum(jnp.sum(w * w, axis=-1, keepdims=True), eps * eps))
    w_n = w * inv_wn                                  # padded (zero) rows stay zero

    # cosine similarities for this C tile, on the MXU: (tile_b, tile_c) f32
    sims = jax.lax.dot_general(xn_sc[...], w_n, (((1,), (1,)), ((), ())),
                               preferred_element_type=jnp.float32)

    col = jax.lax.broadcasted_iota(jnp.int32, sims.shape, 1) + kc * tile_c
    mask = col == cat_ref[...]
    maskf = mask.astype(jnp.float32)

    # Padded columns produce sims == 0 (zero embedding rows). They contribute 0 to the
    # mean-negative sum (exact), but must not win the argmax / hard-negative max.
    if has_c_pad:
        sims_v = jnp.where(col < num_cat, sims, jnp.float32(-3.0e38))
    else:
        sims_v = sims

    # --- contrastive-loss accumulators ---
    pos_tile = jnp.sum(sims * maskf, axis=-1, keepdims=True)
    pos_acc[...] += pos_tile
    if hard_negative:
        neg_bias = jnp.where(mask, jnp.float32(-jnp.inf), jnp.float32(0.0))
        neg_acc[...] = jnp.maximum(
            neg_acc[...], jnp.max(sims_v + neg_bias, axis=-1, keepdims=True))
    else:
        neg_acc[...] += jnp.sum(sims, axis=-1, keepdims=True) - pos_tile

    # --- running argmax (predicted category) ---
    tile_max = jnp.max(sims_v, axis=-1, keepdims=True)
    colf = col.astype(jnp.float32)                    # category ids << 2**24, exact in f32
    tile_idx = jnp.min(jnp.where(sims_v >= tile_max, colf, jnp.float32(3.0e38)),
                       axis=-1, keepdims=True)        # first index achieving the max
    better = tile_max > max_acc[...]
    idx_acc[...] = jnp.where(better, tile_idx, idx_acc[...])
    max_acc[...] = jnp.maximum(max_acc[...], tile_max)

    @pl.when(kc == pl.num_programs(1) - 1)
    def _fini():
        neg = neg_acc[...]
        if not hard_negative:
            neg = neg * inv_cm1
        hinge_ref[...] = jnp.maximum(neg - pos_acc[...] + margin, 0.0)
        pred_ref[...] = idx_acc[...].astype(jnp.int32)


def category_embedding_forward(text_emb, category_emb, categories=None, *,
                               margin=0.2, hard_negative=True,
                               tile_b=256, tile_c=512):
    """CategoryEmbeddingModel.forward from the SBERT embeddings onward.

    text_emb:     [B, D] (bf16/f32) sentence embeddings (dropout = identity, eval mode).
    category_emb: [C, D] category embedding table.
    Returns (predicted_categories [B] int32, loss or None).
    """
    # TODO(synk): the SBERT text encoder and train-mode dropout have no Pallas
    #             equivalent here; this kernel starts from the embeddings.
    B, D = text_emb.shape
    C, D2 = category_emb.shape
    assert D == D2, "embedding dims must match"

    tile_b = _round_up(min(tile_b, _round_up(B, 16)), 16)
    tile_c = _round_up(min(tile_c, _round_up(C, 128)), 128)
    b_pad = _round_up(B, tile_b)
    c_pad = _round_up(C, tile_c)

    x_p = jnp.pad(text_emb, ((0, b_pad - B), (0, 0)))
    w_p = jnp.pad(category_emb, ((0, c_pad - C), (0, 0)))   # zero rows -> sims == 0
    if categories is None:
        cat_p = jnp.full((b_pad, 1), -1, jnp.int32)
    else:
        cat_p = jnp.pad(categories.astype(jnp.int32).reshape(B, 1),
                        ((0, b_pad - B), (0, 0)), constant_values=-1)

    kernel = functools.partial(
        _fused_forward_kernel,
        margin=float(margin), hard_negative=bool(hard_negative),
        tile_c=tile_c, num_cat=C, has_c_pad=(c_pad != C),
        inv_cm1=1.0 / max(C - 1, 1), eps=1e-8)

    pred, hinge = pl.pallas_call(
        kernel,
        out_shape=(jax.ShapeDtypeStruct((b_pad, 1), jnp.int32),
                   jax.ShapeDtypeStruct((b_pad, 1), jnp.float32)),
        grid_spec=pltpu.PrefetchScalarGridSpec(
            num_scalar_prefetch=0,
            grid=(b_pad // tile_b, c_pad // tile_c),         # C (reduction) axis last
            in_specs=[
                pl.BlockSpec((tile_b, D), lambda i, k: (i, 0)),
                pl.BlockSpec((tile_c, D), lambda i, k: (k, 0)),
                pl.BlockSpec((tile_b, 1), lambda i, k: (i, 0)),
            ],
            out_specs=[pl.BlockSpec((tile_b, 1), lambda i, k: (i, 0)),
                       pl.BlockSpec((tile_b, 1), lambda i, k: (i, 0))],
            scratch_shapes=[pltpu.VMEM((tile_b, D), jnp.float32),
                            pltpu.VMEM((tile_b, 1), jnp.float32),
                            pltpu.VMEM((tile_b, 1), jnp.float32),
                            pltpu.VMEM((tile_b, 1), jnp.float32),
                            pltpu.VMEM((tile_b, 1), jnp.float32)],
        ),
        compiler_params=pltpu.CompilerParams(
            dimension_semantics=("parallel", "arbitrary")),
    )(x_p, w_p, cat_p)

    predicted = pred[:B, 0]
    if categories is None:
        return predicted, None
    loss = jnp.sum(hinge[:B, 0]) * (1.0 / B)
    return predicted, loss


# -----------------------------------------------------------------------------
# Pure-JAX references
# -----------------------------------------------------------------------------
def _ref_contrastive_loss(similarities, categories, margin=0.2, hard_negative=True):
    sim = similarities.astype(jnp.float32)
    B, C = sim.shape
    mask = jnp.arange(C)[None, :] == categories[:, None]
    pos = jnp.sum(jnp.where(mask, sim, 0.0), axis=-1)
    if hard_negative:
        neg = jnp.max(jnp.where(mask, -jnp.inf, sim), axis=-1)
    else:
        neg = jnp.sum(jnp.where(mask, 0.0, sim), axis=-1) / (C - 1)
    return jnp.sum(jnp.maximum(neg - pos + margin, 0.0)) / B


def _ref_forward(text_emb, category_emb, categories, margin=0.2, hard_negative=True):
    x = text_emb.astype(jnp.float32)
    w = category_emb.astype(jnp.float32)
    xn = x / jnp.maximum(jnp.linalg.norm(x, axis=-1, keepdims=True), 1e-8)
    wn = w / jnp.maximum(jnp.linalg.norm(w, axis=-1, keepdims=True), 1e-8)
    sims = jnp.matmul(xn, wn.T, precision=jax.lax.Precision.HIGHEST)
    pred = jnp.argmax(sims, axis=-1)
    loss = _ref_contrastive_loss(sims, categories, margin, hard_negative)
    return sims, pred, loss


if __name__ == "__main__":
    key = jax.random.PRNGKey(0)
    k1, k2, k3, k4, k5 = jax.random.split(key, 5)

    # --- standalone ContrastiveLoss kernel (tiled over B and C, bf16 ingest) ---
    B, C = 24, 300                 # deliberately non-aligned: exercises padding paths
    sims = jax.random.uniform(k1, (B, C), jnp.float32, -1.0, 1.0).astype(jnp.bfloat16)
    cats = jax.random.randint(k2, (B,), 0, C, dtype=jnp.int32)

    loss_hard = contrastive_loss(sims, cats, margin=0.2, hard_negative=True,
                                 tile_b=16, tile_c=128)
    loss_mean = contrastive_loss(sims, cats, margin=0.2, hard_negative=False,
                                 tile_b=16, tile_c=128)
    jax.block_until_ready((loss_hard, loss_mean))

    ref_hard = _ref_contrastive_loss(sims, cats, 0.2, True)
    ref_mean = _ref_contrastive_loss(sims, cats, 0.2, False)
    assert jnp.allclose(loss_hard, ref_hard, atol=1e-4, rtol=1e-4), (loss_hard, ref_hard)
    assert jnp.allclose(loss_mean, ref_mean, atol=1e-4, rtol=1e-4), (loss_mean, ref_mean)

    # --- fused CategoryEmbeddingModel forward (cosine sim -> argmax + loss) ---
    Bf, Cf, D = 24, 300, 32        # Cf not a multiple of 128: exercises C padding path
    x = jax.random.normal(k3, (Bf, D), jnp.float32).astype(jnp.bfloat16)
    w = jax.random.normal(k4, (Cf, D), jnp.float32).astype(jnp.bfloat16)
    cats_f = jax.random.randint(k5, (Bf,), 0, Cf, dtype=jnp.int32)

    pred, loss = category_embedding_forward(x, w, cats_f, margin=0.2,
                                            hard_negative=True,
                                            tile_b=16, tile_c=128)
    pred_only, no_loss = category_embedding_forward(x, w, None, margin=0.2,
                                                    hard_negative=True,
                                                    tile_b=16, tile_c=128)
    jax.block_until_ready((pred, loss, pred_only))

    ref_sims, ref_pred, ref_loss = _ref_forward(x, w, cats_f, 0.2, True)
    # tolerant checks: MXU f32 matmul passes can differ slightly from XLA HIGHEST
    picked = ref_sims[jnp.arange(Bf), pred]
    assert bool(jnp.all(picked >= jnp.max(ref_sims, axis=-1) - 2e-2)), "argmax mismatch"
    assert jnp.allclose(loss, ref_loss, atol=2e-2, rtol=2e-2), (loss, ref_loss)
    assert no_loss is None
    assert bool(jnp.all(pred_only == pred)), "inference-path argmax mismatch"

    print("KERNEL_OK")
</pallas_src>

<mosaic_0001>
module attributes {stable_mosaic.version = 11 : i64} {
  func.func @_contrastive_loss_kernel(%arg0: i32, %arg1: i32, %arg2: memref<16x128xbf16, #tpu.memory_space<vmem>>, %arg3: memref<16x1xi32, #tpu.memory_space<vmem>>, %arg4: memref<16x1xf32, #tpu.memory_space<vmem>>, %arg5: memref<16x1xf32, #tpu.memory_space<vmem>>, %arg6: memref<16x1xf32, #tpu.memory_space<vmem>>) attributes {dimension_semantics = [#tpu.dimension_semantics<parallel>, #tpu.dimension_semantics<arbitrary>], iteration_bounds = array<i64: 2, 3>, scalar_prefetch = 0 : i64, scratch_operands = 2 : i64, tpu.core_type = #tpu.core_type<tc>, window_params = [{transform_indices = @transform_0, window_bounds = array<i64: 16, 128>}, {transform_indices = @transform_1, window_bounds = array<i64: 16, 1>}, {transform_indices = @transform_2, window_bounds = array<i64: 16, 1>}]} {
    %c0_i32 = arith.constant 0 : i32
    %0 = arith.cmpi eq, %arg1, %c0_i32 : i32
    %1 = arith.extui %0 : i1 to i32
    %c0_i32_0 = arith.constant 0 : i32
    %2 = arith.cmpi ne, %1, %c0_i32_0 : i32
    scf.if %2 {
      %cst_16 = arith.constant 0.000000e+00 : f32
      %32 = vector.broadcast %cst_16 : f32 to vector<16x1xf32>
      %c0_17 = arith.constant 0 : index
      %c0_18 = arith.constant 0 : index
      %33 = vector.load %arg5[%c0_17, %c0_18] : memref<16x1xf32, #tpu.memory_space<vmem>>, vector<16x1xf32>
      tpu.vector_store %arg5[%c0_17, %c0_18], %32 {strides = array<i32>} : memref<16x1xf32, #tpu.memory_space<vmem>>, vector<16x1xf32>,
      %cst_19 = arith.constant 0xFF800000 : f32
      %34 = vector.broadcast %cst_19 : f32 to vector<16x1xf32>
      %c0_20 = arith.constant 0 : index
      %c0_21 = arith.constant 0 : index
      %35 = vector.load %arg6[%c0_20, %c0_21] : memref<16x1xf32, #tpu.memory_space<vmem>>, vector<16x1xf32>
      tpu.vector_store %arg6[%c0_20, %c0_21], %34 {strides = array<i32>} : memref<16x1xf32, #tpu.memory_space<vmem>>, vector<16x1xf32>,
    } else {
    }
    %c0 = arith.constant 0 : index
    %c0_1 = arith.constant 0 : index
    %3 = vector.load %arg2[%c0, %c0_1] : memref<16x128xbf16, #tpu.memory_space<vmem>>, vector<16x128xbf16>
    %4 = arith.extf %3 : vector<16x128xbf16> to vector<16x128xf32>
    %c0_2 = arith.constant 0 : index
    %c0_3 = arith.constant 0 : index
    %5 = vector.load %arg3[%c0_2, %c0_3] : memref<16x1xi32, #tpu.memory_space<vmem>>, vector<16x1xi32>
    %6 = tpu.iota {dimensions = array<i32: 1>} : vector<16x128xi32>
    %c128_i32 = arith.constant 128 : i32
    %7 = arith.muli %arg1, %c128_i32 : i32
    %8 = vector.broadcast %7 : i32 to vector<16x128xi32>
    %9 = arith.addi %6, %8 : vector<16x128xi32>
    %10 = vector.broadcast %5 : vector<16x1xi32> to vector<16x128xi32>
    %11 = arith.cmpi eq, %9, %10 : vector<16x128xi32>
    %12 = arith.extui %11 : vector<16x128xi1> to vector<16x128xi32>
    %13 = arith.sitofp %12 : vector<16x128xi32> to vector<16x128xf32>
    %14 = arith.mulf %4, %13 : vector<16x128xf32>
    %cst = arith.constant dense<0.000000e+00> : vector<16xf32>
    %15 = vector.multi_reduction <add>, %14, %cst [1] : vector<16x128xf32> to vector<16xf32>
    %16 = vector.shape_cast %15 : vector<16xf32> to vector<16x1xf32>
    %c0_4 = arith.constant 0 : index
    %c0_5 = arith.constant 0 : index
    %17 = vector.load %arg5[%c0_4, %c0_5] : memref<16x1xf32, #tpu.memory_space<vmem>>, vector<16x1xf32>
    %18 = arith.addf %17, %16 : vector<16x1xf32>
    %c0_6 = arith.constant 0 : index
    %c0_7 = arith.constant 0 : index
    %19 = vector.load %arg5[%c0_6, %c0_7] : memref<16x1xf32, #tpu.memory_space<vmem>>, vector<16x1xf32>
    tpu.vector_store %arg5[%c0_6, %c0_7], %18 {strides = array<i32>} : memref<16x1xf32, #tpu.memory_space<vmem>>, vector<16x1xf32>,
    %cst_8 = arith.constant 0xFF800000 : f32
    %cst_9 = arith.constant 0.000000e+00 : f32
    %20 = vector.broadcast %cst_8 : f32 to vector<16x128xf32>
    %21 = vector.broadcast %cst_9 : f32 to vector<16x128xf32>
    %22 = arith.select %11, %20, %21 : vector<16x128xi1>, vector<16x128xf32>
    %23 = arith.addf %4, %22 : vector<16x128xf32>
    %cst_10 = arith.constant dense<0xFF800000> : vector<16xf32>
    %24 = vector.multi_reduction <maximumf>, %23, %cst_10 [1] : vector<16x128xf32> to vector<16xf32>
    %25 = vector.shape_cast %24 : vector<16xf32> to vector<16x1xf32>
    %c0_11 = arith.constant 0 : index
    %c0_12 = arith.constant 0 : index
    %26 = vector.load %arg6[%c0_11, %c0_12] : memref<16x1xf32, #tpu.memory_space<vmem>>, vector<16x1xf32>
    %27 = arith.maximumf %26, %25 : vector<16x1xf32>
    %c0_13 = arith.constant 0 : index
    %c0_14 = arith.constant 0 : index
    %28 = vector.load %arg6[%c0_13, %c0_14] : memref<16x1xf32, #tpu.memory_space<vmem>>, vector<16x1xf32>
    tpu.vector_store %arg6[%c0_13, %c0_14], %27 {strides = array<i32>} : memref<16x1xf32, #tpu.memory_space<vmem>>, vector<16x1xf32>,
    %c2_i32 = arith.constant 2 : i32
    %29 = arith.cmpi eq, %arg1, %c2_i32 : i32
    %30 = arith.extui %29 : i1 to i32
    %c0_i32_15 = arith.constant 0 : i32
    %31 = arith.cmpi ne, %30, %c0_i32_15 : i32
    scf.if %31 {
      %c0_16 = arith.constant 0 : index
      %c0_17 = arith.constant 0 : index
      %32 = vector.load %arg6[%c0_16, %c0_17] : memref<16x1xf32, #tpu.memory_space<vmem>>, vector<16x1xf32>
      %c0_18 = arith.constant 0 : index
      %c0_19 = arith.constant 0 : index
      %33 = vector.load %arg5[%c0_18, %c0_19] : memref<16x1xf32, #tpu.memory_space<vmem>>, vector<16x1xf32>
      %34 = arith.subf %32, %33 : vector<16x1xf32>
      %cst_20 = arith.constant 2.000000e-01 : f32
      %35 = vector.broadcast %cst_20 : f32 to vector<16x1xf32>
      %36 = arith.addf %34, %35 : vector<16x1xf32>
      %cst_21 = arith.constant 0.000000e+00 : f32
      %37 = vector.broadcast %cst_21 : f32 to vector<16x1xf32>
      %38 = arith.maximumf %36, %37 : vector<16x1xf32>
      %c0_22 = arith.constant 0 : index
      %c0_23 = arith.constant 0 : index
      %39 = vector.load %arg4[%c0_22, %c0_23] : memref<16x1xf32, #tpu.memory_space<vmem>>, vector<16x1xf32>
      tpu.vector_store %arg4[%c0_22, %c0_23], %38 {strides = array<i32>} : memref<16x1xf32, #tpu.memory_space<vmem>>, vector<16x1xf32>,
    } else {
    }
    return
  }
  func.func @transform_0(%arg0: i32, %arg1: i32) -> (i32, i32) {
    %c0_i32 = arith.constant 0 : i32
    return %arg0, %arg1 : i32, i32
  }
  func.func @transform_1(%arg0: i32, %arg1: i32) -> (i32, i32) {
    %c0_i32 = arith.constant 0 : i32
    %c0_i32_0 = arith.constant 0 : i32
    return %arg0, %c0_i32 : i32, i32
  }
  func.func @transform_2(%arg0: i32, %arg1: i32) -> (i32, i32) {
    %c0_i32 = arith.constant 0 : i32
    %c0_i32_0 = arith.constant 0 : i32
    return %arg0, %c0_i32 : i32, i32
  }
}

</mosaic_0001>

<llo_original>
// kernel: tpu_custom_call.1
$region0: #{tpu_custom_call.1}
  #allocation0 [shape = 'u32[]', space=smem, size = 0x4, offset = 0x4, fixed_abs, tag = 'smem constant byte address 0x4 - core index']
  #allocation1 [shape = 'u32[72,128]{1,0:T(1,128)}', space=vmem, size = 0x9000, scoped, tag = 'internal scratch']
  #allocation2 [shape = 'f32[16,1]{1,0:T(8,128)}', space=vmem, size = 0x2000, scoped, tag = 'scratch operand']
  #allocation3 [shape = 'f32[16,1]{1,0:T(8,128)}', space=vmem, size = 0x2000, scoped, tag = 'scratch operand']
  %s0 = inlined_call_operand.hbm [shape: bf16[32,384], index: 0, kind: input, shape index: {}]
  %s1 = inlined_call_operand.vmem [shape: s32[32,1], index: 1, kind: input, shape index: {}]
  %s2 = inlined_call_operand.vmem [shape: f32[32,1], index: 2, kind: output, shape index: {}]
  %s3 = sld [smem:[#allocation0]]
  $region53: #{tpu_custom_call.1} parent=0
    _
  %s5 = ssub.s32 1, %s3
  %s6 = scalar_select 0, %s5, %s3
  $region1: #{tpu_custom_call.1} parent=0
    #allocation4 [shape = 'u8[8192]{0}', space=vmem, size = 0x2000, scoped, tag = 'input window, operand 0']
    #allocation5 [shape = 's32[2]{0}', space=sflag, size = 0x8, scoped, tag = 'scoped memory for tpu_custom_call.1']
    %7 = vsyncpa [#allocation5], 0
    %s8 = scalar_lea.sflag [#allocation5], 1
    %9 = vsyncpa %s8, 0
    loop: start=0, step=1, limit=8
    $region2: #{tpu_custom_call.1} parent=1 // loop_pre_header
      _
    $region3: #{tpu_custom_call.1} parent=1 // loop_header
      %s11 = sphi 0, %s15
      %p12 = scmp.ge.s32.totalorder %s11, 8
      %s18 = sphi 0, %s30
      %s19 = sphi 0, %s26
      %s20 = sphi 0, %s18
      %s21 = sphi 0, %s19
      %s22 = sphi 0, %s20
      %s23 = sphi 0, %s21
      %s35 = sphi 0, %s37
      %s38 = sphi 0, %s35
      %s39 = sphi 0, %s38
      %s55 = sphi 0, %s39
      %s61 = sphi 0, %s63
      %s64 = sphi 0, %s61
      %s65 = sphi 0, %s64
      %s81 = sphi 0, %s65
      %s87 = sphi 0, %s89
      %s90 = sphi 0, %s87
      %s91 = sphi 0, %s90
      %s107 = sphi 0, %s91
    $region4: #{tpu_custom_call.1} parent=1 // loop_header_branch
      %14 = sbr.rel (%p12) target = $region8
    $region5: #{tpu_custom_call.1} parent=1 // loop_body
      %s16 = ssub.s32 %s11, 1
      %s17 = ssub.s32 %s11, 2
      %s24 = sadd.s32 1, %s19
      %p25 = scmp.ge.s32.totalorder %s24, 3
      %s26 = scalar_select %p25, 0, %s24
      %s27 = sadd.s32 1, %s18
      %s28 = scalar_select %p25, %s27, %s18
      %p29 = scmp.ge.s32.totalorder %s28, 2
      %s30 = scalar_select %p29, 0, %s28
      %s31 = ssub.s32 %s18, %s30
      %s32 = ssub.s32 %s19, %s26
      %s33 = sor.u32 %s31, %s32
      %p34 = scmp.eq.s32.totalorder %s33, 0
      %s36 = sadd.s32 %s35, 1
      %s37 = scalar_select %p34, %s35, %s36
      %p40 = pneg %p34
      %p41 = scmp.eq.s32.totalorder %s11, 5
      %p42 = por %p40, %p41
      %p43 = scmp.ne.s32.totalorder %s35, %s38
      %p44 = scmp.eq.s32.totalorder %s11, 0
      %p45 = por %p43, %p44
      %p46 = scmp.ne.s32.totalorder %s35, %s38
      %p47 = scmp.eq.s32.totalorder %s16, 5
      %p48 = por %p46, %p47
      %p49 = scmp.ne.s32.totalorder %s38, %s39
      %p50 = scmp.eq.s32.totalorder %s16, 0
      %p51 = por %p49, %p50
      %p52 = scmp.ne.s32.totalorder %s38, %s39
      %p53 = scmp.eq.s32.totalorder %s17, 5
      %p54 = por %p52, %p53
      %p56 = scmp.ne.s32.totalorder %s39, %s55
      %p57 = scmp.eq.s32.totalorder %s17, 0
      %p58 = por %p56, %p57
      %s59 = ssub.s32 %s18, %s30
      %p60 = scmp.eq.s32.totalorder %s59, 0
      %s62 = sadd.s32 %s61, 1
      %s63 = scalar_select %p60, %s61, %s62
      %p66 = pneg %p60
      %p67 = scmp.eq.s32.totalorder %s11, 5
      %p68 = por %p66, %p67
      %p69 = scmp.ne.s32.totalorder %s61, %s64
      %p70 = scmp.eq.s32.totalorder %s11, 0
      %p71 = por %p69, %p70
      %p72 = scmp.ne.s32.totalorder %s61, %s64
      %p73 = scmp.eq.s32.totalorder %s16, 5
      %p74 = por %p72, %p73
      %p75 = scmp.ne.s32.totalorder %s64, %s65
      %p76 = scmp.eq.s32.totalorder %s16, 0
      %p77 = por %p75, %p76
      %p78 = scmp.ne.s32.totalorder %s64, %s65
      %p79 = scmp.eq.s32.totalorder %s17, 5
      %p80 = por %p78, %p79
      %p82 = scmp.ne.s32.totalorder %s65, %s81
      %p83 = scmp.eq.s32.totalorder %s17, 0
      %p84 = por %p82, %p83
      %s85 = ssub.s32 %s18, %s30
      %p86 = scmp.eq.s32.totalorder %s85, 0
      %s88 = sadd.s32 %s87, 1
      %s89 = scalar_select %p86, %s87, %s88
      %p92 = pneg %p86
      %p93 = scmp.eq.s32.totalorder %s11, 5
      %p94 = por %p92, %p93
      %p95 = scmp.ne.s32.totalorder %s87, %s90
      %p96 = scmp.eq.s32.totalorder %s11, 0
      %p97 = por %p95, %p96
      %p98 = scmp.ne.s32.totalorder %s87, %s90
      %p99 = scmp.eq.s32.totalorder %s16, 5
      %p100 = por %p98, %p99
      %p101 = scmp.ne.s32.totalorder %s90, %s91
      %p102 = scmp.eq.s32.totalorder %s16, 0
      %p103 = por %p101, %p102
      %p104 = scmp.ne.s32.totalorder %s90, %s91
      %p105 = scmp.eq.s32.totalorder %s17, 5
      %p106 = por %p104, %p105
      %p108 = scmp.ne.s32.totalorder %s91, %s107
      %p109 = scmp.eq.s32.totalorder %s17, 0
      %p110 = por %p108, %p109
      %p111 = scmp.le.s32.totalorder 1, %s11
      %p112 = scmp.lt.s32.totalorder %s11, 7
      %p113 = pnand %p111, %p112
      %p114 = pneg %p113
      // Predicated region
      $region9: #{tpu_custom_call.1} parent=5 // pred_check
        _
      $region10: #{tpu_custom_call.1} parent=5 // pred_check_branch
        %116 = sbr.rel (%p113) target = $region12
      $region11: #{tpu_custom_call.1} parent=5 // pred_region
        %s117 = ssub.s32 %s11, 1
      $region12: #{tpu_custom_call.1} parent=5 // pred_fallthru
        _
      %p118 = scmp.lt.s32.totalorder %s11, 6
      // Predicated region
      $region13: #{tpu_custom_call.1} parent=5 // pred_check
        %p119 = pneg %p118
      $region14: #{tpu_custom_call.1} parent=5 // pred_check_branch
        %121 = sbr.rel (%p119) target = $region16
      $region15: #{tpu_custom_call.1} parent=5 // pred_region
        // Predicated region
        $region17: #{tpu_custom_call.1} parent=15 // pred_check
          %p122 = pneg %p45
        $region18: #{tpu_custom_call.1} parent=15 // pred_check_branch
          %124 = sbr.rel (%p122) target = $region20
        $region19: #{tpu_custom_call.1} parent=15 // pred_region
          %s125 = sand.u32 %s35, 1
          %s126 = scalar_lea.sflag [#allocation5], %s125
          %s127 = sand.u32 %s35, 1
          %s128 = smul.addr %s127, 8
          %s129 = scalar_lea.vmem [#allocation4], %s128
          %s130 = smul.u32 2, %s18
          %132 = vsyncadd %s126, 0
          %s133 = smul.addr %s130, 3
          %s134 = sadd.s32 %s19, %s133
          %s135 = smul.addr %s134, 4
          %s136 = scalar_lea.hbm %s0, %s135
          %s137 = sshll.u32 %s136, 4
          %s138 = int_to_ptr.hbm [resolvable:$true] %s137
          %s139 = sshll.u32 %s129, 4
          %s140 = int_to_ptr.vmem [resolvable:$true] %s139
          %145 = dma.hbm_to_vmem [thread:$0]  %s138, 128, %s140, %s126, 192, 64, 4
        $region20: #{tpu_custom_call.1} parent=15 // pred_fallthru
          _
        // Predicated region
        $region21: #{tpu_custom_call.1} parent=15 // pred_check
          %p146 = pneg %p71
        $region22: #{tpu_custom_call.1} parent=15 // pred_check_branch
          %148 = sbr.rel (%p146) target = $region24
        $region23: #{tpu_custom_call.1} parent=15 // pred_region
          %s149 = smul.u32 2, %s18
          %p150 = scmp.lt.s32.totalorder %s149, 3
          %s151 = scalar_select %p150, %s149, 3
          %s152 = smul.addr %s151, 8
          %s153 = scalar_lea.vmem %s1, %s152
          %s154 = smul.u32 2, %s18
        $region24: #{tpu_custom_call.1} parent=15 // pred_fallthru
          _
      $region16: #{tpu_custom_call.1} parent=5 // pred_fallthru
        _
      %p155 = scmp.le.s32.totalorder 1, %s11
      %p156 = scmp.lt.s32.totalorder %s11, 7
      %p157 = pnand %p155, %p156
      %p158 = pneg %p157
      // Predicated region
      $region25: #{tpu_custom_call.1} parent=5 // pred_check
        _
      $region26: #{tpu_custom_call.1} parent=5 // pred_check_branch
        %160 = sbr.rel (%p157) target = $region28
      $region27: #{tpu_custom_call.1} parent=5 // pred_region
        %s161 = ssub.s32 %s11, 1
        %s162 = sand.u32 %s38, 1
        %s163 = scalar_lea.sflag [#allocation5], %s162
        %s164 = sand.u32 %s38, 1
        %s165 = smul.addr %s164, 8
        %s166 = scalar_lea.vmem [#allocation4], %s165
        // Predicated region
        $region29: #{tpu_custom_call.1} parent=27 // pred_check
          %p167 = pneg %p51
        $region30: #{tpu_custom_call.1} parent=27 // pred_check_branch
          %169 = sbr.rel (%p167) target = $region32
        $region31: #{tpu_custom_call.1} parent=27 // pred_region
          %171 = dma.done %s163, 128
        $region32: #{tpu_custom_call.1} parent=27 // pred_fallthru
          _
        %s172 = sand.u32 %s38, 1
        %s173 = scalar_lea.sflag [#allocation5], %s172
        %s174 = sand.u32 %s38, 1
        %s175 = smul.addr %s174, 8
        %s176 = scalar_lea.vmem [#allocation4], %s175
        %p177 = pneg %p51
        %p178 = pneg %p48
        %s179 = smul.u32 2, %s20
        %p180 = scmp.lt.s32.totalorder %s179, 3
        %s181 = scalar_select %p180, %s179, 3
        %s182 = smul.addr %s181, 8
        %s183 = scalar_lea.vmem %s1, %s182
        %p184 = pneg %p77
        %p185 = pneg %p74
        %p186 = pneg %p103
        %p187 = pneg %p100
        %s188 = smul.u32 2, %s20
        %p189 = scmp.lt.s32.totalorder %s188, 3
        %s190 = scalar_select %p189, %s188, 3
        %s191 = smul.addr %s190, 8
        %s192 = scalar_lea.vmem %s2, %s191
        %s193 = smul.u32 2, %s20
        %s194 = smul.u32 2, %s20
        %p195 = scmp.lt.s32.totalorder %s194, 3
        %s196 = scalar_select %p195, %s194, 3
        %s197 = smul.addr %s196, 8
        %s198 = scalar_lea.vmem %s1, %s197
        %s199 = smul.u32 2, %s20
        %s200 = smul.u32 2, %s20
        %p201 = scmp.lt.s32.totalorder %s200, 3
        %s202 = scalar_select %p201, %s200, 3
        %s203 = smul.addr %s202, 8
        %s204 = scalar_lea.vmem %s2, %s203
        %s205 = smul.u32 2, %s20
        %p206 = scmp.eq.s32.totalorder %s21, 0
        // Predicated region
        $region33: #{tpu_custom_call.1} parent=27 // pred_check
          %p207 = pneg %p206
        $region34: #{tpu_custom_call.1} parent=27 // pred_check_branch
          %209 = sbr.rel (%p207) target = $region36
        $region35: #{tpu_custom_call.1} parent=27 // pred_region
          %vm210 = vcmask 7168
          %211 = vst.msk [vmem:[#allocation2] sm:$0xff] %vm210, 0.0
          %212 = vst.msk [vmem:[#allocation2 + $0x8] sm:$0xff] %vm210, 0.0
          %213 = vst.msk [vmem:[#allocation3] sm:$0xff] %vm210, -inf
          %214 = vst.msk [vmem:[#allocation3 + $0x8] sm:$0xff] %vm210, -inf
        $region36: #{tpu_custom_call.1} parent=27 // pred_fallthru
          _
        %v215 = vld [vmem:[%s166] sm:$0xf]
        %v216 = vld [vmem:[%s166 + $0x4] sm:$0xf]
        %v217 = vunpack.c.l.bf16 %v215
        %v218 = vunpack.c.l.bf16 %v216
        %v219 = vld [vmem:[%s198] sm:$0xff]
        %v220 = vld [vmem:[%s198 + $0x8] sm:$0xff]
        %v221 = vlaneseq
        %v222 = vand.u32 %v221, 127
        %s223 = smul.u32 %s21, 128
        %v224 = vstv %s223
        %v225 = vadd.s32 %v222, %v224
        %226 = vset.pattern.permute.xlu0 0
        %227 = vperm.xlu0 %226, %v219
        %v228 = vpop.permute.xlu0 %227
        %229 = vset.pattern.permute.xlu0 0
        %230 = vperm.xlu0 %229, %v220
        %v231 = vpop.permute.xlu0 %230
        %vm232 = vcmp.eq.s32.totalorder %v225, %v228
        %vm233 = vcmp.eq.s32.totalorder %v225, %v231
        %v234 = vsel %vm232, 1, 0
        %v235 = vsel %vm233, 1, 0
        %v236 = vcvt.s32.f32 %v234
        %v237 = vcvt.s32.f32 %v235
        %v238 = vmul.f32 %v217, %v236
        %v239 = vmul.f32 %v218, %v237
        %240 = vadd.xlane.f32.xlu0 %v238
        %v241 = vpop.xlane.xlu0 %240
        %242 = vadd.xlane.f32.xlu0 %v239
        %v243 = vpop.xlane.xlu0 %242
        %v244 = vld [vmem:[#allocation2] sm:$0xff]
        %v245 = vld [vmem:[#allocation2 + $0x8] sm:$0xff]
        %v246 = vadd.f32 %v244, %v241
        %v247 = vadd.f32 %v245, %v243
        %vm248 = vcmask 7168
        %249 = vst.msk [vmem:[#allocation2] sm:$0xff] %vm248, %v246
        %250 = vst.msk [vmem:[#allocation2 + $0x8] sm:$0xff] %vm248, %v247
        %v251 = vsel %vm232, -inf, 0.0
        %v252 = vsel %vm233, -inf, 0.0
        %v253 = vadd.f32 %v217, %v251
        %v254 = vadd.f32 %v218, %v252
        %255 = vmax.xlane.f32.xlu0 %v253
        %v256 = vpop.xlane.xlu0 %255
        %257 = vmax.xlane.f32.xlu0 %v254
        %v258 = vpop.xlane.xlu0 %257
        %v259 = vld [vmem:[#allocation3] sm:$0xff]
        %v260 = vld [vmem:[#allocation3 + $0x8] sm:$0xff]
        %v261 = vmax.f32 %v259, %v256
        %v262 = vmax.f32 %v260, %v258
        %263 = vst.msk [vmem:[#allocation3] sm:$0xff] %vm248, %v261
        %264 = vst.msk [vmem:[#allocation3 + $0x8] sm:$0xff] %vm248, %v262
        %p265 = scmp.eq.s32.totalorder %s21, 2
        // Predicated region
        $region37: #{tpu_custom_call.1} parent=27 // pred_check
          %p266 = pneg %p265
        $region38: #{tpu_custom_call.1} parent=27 // pred_check_branch
          %268 = sbr.rel (%p266) target = $region40
        $region39: #{tpu_custom_call.1} parent=27 // pred_region
          %v269 = vld [vmem:[#allocation3] sm:$0xff]
          %v270 = vld [vmem:[#allocation3 + $0x8] sm:$0xff]
          %v271 = vld [vmem:[#allocation2] sm:$0xff]
          %v272 = vld [vmem:[#allocation2 + $0x8] sm:$0xff]
          %v273 = vsub.f32 %v269, %v271
          %v274 = vsub.f32 %v270, %v272
          %v275 = vadd.f32 %v273, 0.2
          %v276 = vadd.f32 %v274, 0.2
          %v277 = vmax.f32 %v275, 0.0
          %v278 = vmax.f32 %v276, 0.0
          %279 = vst.msk [vmem:[%s204] sm:$0xff] %vm248, %v277
          %280 = vst.msk [vmem:[%s204 + $0x8] sm:$0xff] %vm248, %v278
        $region40: #{tpu_custom_call.1} parent=27 // pred_fallthru
          _
        %s281 = smul.u32 2, %s20
        %p282 = scmp.lt.s32.totalorder %s281, 3
        %s283 = scalar_select %p282, %s281, 3
        %s284 = smul.addr %s283, 8
        %s285 = scalar_lea.vmem %s2, %s284
        // Predicated region
        $region41: #{tpu_custom_call.1} parent=27 // pred_check
          %p286 = pneg %p100
        $region42: #{tpu_custom_call.1} parent=27 // pred_check_branch
          %288 = sbr.rel (%p286) target = $region44
        $region43: #{tpu_custom_call.1} parent=27 // pred_region
          %s289 = smul.u32 2, %s20
        $region44: #{tpu_custom_call.1} parent=27 // pred_fallthru
          _
      $region28: #{tpu_custom_call.1} parent=5 // pred_fallthru
        _
      %p290 = scmp.le.s32.totalorder 2, %s11
      // Predicated region
      $region45: #{tpu_custom_call.1} parent=5 // pred_check
        %p291 = pneg %p290
      $region46: #{tpu_custom_call.1} parent=5 // pred_check_branch
        %293 = sbr.rel (%p291) target = $region48
      $region47: #{tpu_custom_call.1} parent=5 // pred_region
        %s294 = ssub.s32 %s11, 2
        // Predicated region
        $region49: #{tpu_custom_call.1} parent=47 // pred_check
          %p295 = pneg %p106
        $region50: #{tpu_custom_call.1} parent=47 // pred_check_branch
          %297 = sbr.rel (%p295) target = $region52
        $region51: #{tpu_custom_call.1} parent=47 // pred_region
          %s298 = smul.u32 2, %s22
          %p299 = scmp.lt.s32.totalorder %s298, 3
          %s300 = scalar_select %p299, %s298, 3
          %s301 = smul.addr %s300, 8
          %s302 = scalar_lea.vmem %s2, %s301
        $region52: #{tpu_custom_call.1} parent=47 // pred_fallthru
          _
      $region48: #{tpu_custom_call.1} parent=5 // pred_fallthru
        _
    $region6: #{tpu_custom_call.1} parent=1 // loop_footer
      %s15 = sadd.s32 1, %s11
    $region7: #{tpu_custom_call.1} parent=1 // loop_footer_branch
      %10 = sbr.rel target = $region3
    $region8: #{tpu_custom_call.1} parent=1 // loop_exit
      _
    %303 = vsyncpa [#allocation5], 1
    %s304 = scalar_lea.sflag [#allocation5], 1
    %305 = vsyncpa %s304, 1

</llo_original>
